<compile_context>
chip_gen: v7x
topology: tpu7x:2x2x1
jax: 0.10.0
libtpu: 0.0.40
codegen_flags: <defaults>
</compile_context>

<pallas_src>
import jax
import jax.numpy as jnp
from jax.experimental import pallas as pl
from jax.experimental.pallas import tpu as pltpu

IN_FEATURES = 10
OUT_FEATURES = 10

# Max lanes (batch columns) per tile.  256*TB bytes of double-buffered in+out:
# TB=32768 -> ~8 MiB, safe under every chip's default scoped-VMEM limit
# (v5e 16 MiB, v6e 32 MiB, v7x 32 MiB scoped / 64 MiB physical).
DEFAULT_MAX_TB = 32768


def is_training_check_kernel(xt_ref, w_ref, b_ref, o_ref):
    # xt_ref: [IN, TB]   batch-on-lanes input tile
    # w_ref:  [OUT, IN]  PyTorch Linear weight, used as-is; VMEM-resident
    # b_ref:  [OUT, 1]   bias (f32); VMEM-resident
    # o_ref:  [OUT, TB]  lane-dense output tile
    y = jnp.dot(w_ref[...], xt_ref[...], preferred_element_type=jnp.float32)
    y = y + b_ref[...]                      # (OUT,1) broadcasts over lanes (f32)
    o_ref[...] = jnp.maximum(y, 0.0).astype(o_ref.dtype)   # ReLU, single VPU max


def is_training_check(x, weight, bias, *, max_tb=DEFAULT_MAX_TB):
    """relu(x @ weight.T + bias); weight in PyTorch Linear layout [out, in]."""
    B, fin = x.shape
    assert fin == IN_FEATURES

    # --- per-call prep (in practice precomputed once at parameter setup) ---
    x_t = x.T                                           # [IN, B], lane-dense
    w = weight.astype(x.dtype)                          # MXU operand dtype
    bias2d = bias.reshape(OUT_FEATURES, 1).astype(jnp.float32)  # f32 bias add

    # Batch tile on the lane axis: full batch if it fits, else a multiple of 128.
    if B <= max_tb:
        TB = B                      # full-extent lane block (always legal)
    else:
        TB = max(128, max_tb - (max_tb % 128))   # multiple of 128; partial edge ok
    grid = (pl.cdiv(B, TB),)

    out_t = pl.pallas_call(
        is_training_check_kernel,
        out_shape=jax.ShapeDtypeStruct((OUT_FEATURES, B), x.dtype),
        grid_spec=pltpu.PrefetchScalarGridSpec(
            num_scalar_prefetch=0,
            grid=grid,
            in_specs=[
                # batch tiles march along the lane axis
                pl.BlockSpec((IN_FEATURES, TB), lambda i: (0, i)),
                # weight / bias stay resident in VMEM across all batch tiles
                pl.BlockSpec((OUT_FEATURES, IN_FEATURES), lambda i: (0, 0)),
                pl.BlockSpec((OUT_FEATURES, 1), lambda i: (0, 0)),
            ],
            out_specs=pl.BlockSpec((OUT_FEATURES, TB), lambda i: (0, i)),
        ),
        compiler_params=pltpu.CompilerParams(
            dimension_semantics=("parallel",),
        ),
    )(x_t, w, bias2d)

    # Back to the module's [B, OUT] layout (absorbed by the consumer in practice).
    return out_t.T


if __name__ == "__main__":
    key = jax.random.PRNGKey(0)
    kx, kw1, kb1 = jax.random.split(key, 3)

    B = 64
    x = jax.random.normal(kx, (B, IN_FEATURES), dtype=jnp.float32)

    # Deterministic init mimicking torch.nn.Linear(10, 10):
    # uniform(-1/sqrt(in_features), 1/sqrt(in_features)) for weight and bias.
    bound = 1.0 / (IN_FEATURES ** 0.5)
    weight1 = jax.random.uniform(
        kw1, (OUT_FEATURES, IN_FEATURES), minval=-bound, maxval=bound,
        dtype=jnp.float32)
    bias1 = jax.random.uniform(
        kb1, (OUT_FEATURES,), minval=-bound, maxval=bound, dtype=jnp.float32)
    # linear2 exists in the module but is unused: training=True -> linear1 path.

    out = is_training_check(x, weight1, bias1)
    out = jax.block_until_ready(out)

    # Reference check in plain JAX: relu(linear1(x))
    ref = jnp.maximum(x @ weight1.T + bias1, 0.0)
    assert out.shape == (B, OUT_FEATURES)
    assert jnp.allclose(out, ref, atol=1e-5, rtol=1e-5), "mismatch vs reference"

    print("KERNEL_OK")
</pallas_src>

<mosaic_0001>
module attributes {stable_mosaic.version = 11 : i64} {
  func.func @is_training_check_kernel(%arg0: i32, %arg1: memref<10x64xf32, #tpu.memory_space<vmem>>, %arg2: memref<10x10xf32, #tpu.memory_space<vmem>>, %arg3: memref<10x1xf32, #tpu.memory_space<vmem>>, %arg4: memref<10x64xf32, #tpu.memory_space<vmem>>) attributes {dimension_semantics = [#tpu.dimension_semantics<parallel>], iteration_bounds = array<i64: 1>, scalar_prefetch = 0 : i64, scratch_operands = 0 : i64, tpu.core_type = #tpu.core_type<tc>, window_params = [{transform_indices = @transform_0, window_bounds = array<i64: 10, 64>}, {pipeline_mode = #tpu.pipeline_mode<synchronous>, transform_indices = @transform_1, window_bounds = array<i64: 10, 10>}, {pipeline_mode = #tpu.pipeline_mode<synchronous>, transform_indices = @transform_2, window_bounds = array<i64: 10, 1>}, {transform_indices = @transform_3, window_bounds = array<i64: 10, 64>}]} {
    %c0 = arith.constant 0 : index
    %c0_0 = arith.constant 0 : index
    %0 = vector.load %arg2[%c0, %c0_0] : memref<10x10xf32, #tpu.memory_space<vmem>>, vector<10x10xf32>
    %c0_1 = arith.constant 0 : index
    %c0_2 = arith.constant 0 : index
    %1 = vector.load %arg1[%c0_1, %c0_2] : memref<10x64xf32, #tpu.memory_space<vmem>>, vector<10x64xf32>
    %cst = arith.constant dense<0.000000e+00> : vector<10x64xf32>
    %2 = tpu.matmul %0, %1, %cst {dimension_numbers = #tpu.dot_dimension_numbers<[1], [0], [0], [1], [0, 0, 1, 1], [], []>} : vector<10x10xf32>, vector<10x64xf32>, vector<10x64xf32> -> vector<10x64xf32>
    %c0_3 = arith.constant 0 : index
    %c0_4 = arith.constant 0 : index
    %3 = vector.load %arg3[%c0_3, %c0_4] : memref<10x1xf32, #tpu.memory_space<vmem>>, vector<10x1xf32>
    %4 = vector.broadcast %3 : vector<10x1xf32> to vector<10x64xf32>
    %5 = arith.addf %2, %4 : vector<10x64xf32>
    %cst_5 = arith.constant 0.000000e+00 : f32
    %6 = vector.broadcast %cst_5 : f32 to vector<10x64xf32>
    %7 = arith.maximumf %5, %6 : vector<10x64xf32>
    %c0_6 = arith.constant 0 : index
    %c0_7 = arith.constant 0 : index
    %8 = vector.load %arg4[%c0_6, %c0_7] : memref<10x64xf32, #tpu.memory_space<vmem>>, vector<10x64xf32>
    tpu.vector_store %arg4[%c0_6, %c0_7], %7 {strides = array<i32>} : memref<10x64xf32, #tpu.memory_space<vmem>>, vector<10x64xf32>,
    return
  }
  func.func @transform_0(%arg0: i32) -> (i32, i32) {
    %c0_i32 = arith.constant 0 : i32
    %c0_i32_0 = arith.constant 0 : i32
    return %c0_i32, %arg0 : i32, i32
  }
  func.func @transform_1(%arg0: i32) -> (i32, i32) {
    %c0_i32 = arith.constant 0 : i32
    %c0_i32_0 = arith.constant 0 : i32
    %c0_i32_1 = arith.constant 0 : i32
    return %c0_i32, %c0_i32_0 : i32, i32
  }
  func.func @transform_2(%arg0: i32) -> (i32, i32) {
    %c0_i32 = arith.constant 0 : i32
    %c0_i32_0 = arith.constant 0 : i32
    %c0_i32_1 = arith.constant 0 : i32
    return %c0_i32, %c0_i32_0 : i32, i32
  }
  func.func @transform_3(%arg0: i32) -> (i32, i32) {
    %c0_i32 = arith.constant 0 : i32
    %c0_i32_0 = arith.constant 0 : i32
    return %c0_i32, %arg0 : i32, i32
  }
}

</mosaic_0001>

<llo_original>
// kernel: tpu_custom_call.1
$region0: #{tpu_custom_call.1}
  #allocation0 [shape = 'u32[]', space=smem, size = 0x4, offset = 0x4, fixed_abs, tag = 'smem constant byte address 0x4 - core index']
  #allocation1 [shape = 'u32[144,128]{1,0:T(1,128)}', space=vmem, size = 0x12000, scoped, tag = 'internal scratch']
  %s0 = inlined_call_operand.vmem [shape: f32[10,64], index: 0, kind: input, shape index: {}]
  %s1 = inlined_call_operand.hbm [shape: f32[10,10], index: 1, kind: input, shape index: {}]
  %s2 = inlined_call_operand.vmem [shape: f32[10,1], index: 2, kind: input, shape index: {}]
  %s3 = inlined_call_operand.hbm [shape: f32[10,64], index: 3, kind: output, shape index: {}]
  %s4 = sld [smem:[#allocation0]]
  $region26: #{tpu_custom_call.1} parent=0
    _
  %s6 = ssub.s32 1, %s4
  %s7 = scalar_select 0, %s6, %s4
  $region1: #{tpu_custom_call.1} parent=0
    #allocation2 [shape = 'u8[8192]{0}', space=vmem, size = 0x2000, scoped, tag = 'input window, operand 1, single buffered']
    #allocation3 [shape = 's32[1]{0}', space=sflag, size = 0x4, scoped, tag = 'scoped memory for tpu_custom_call.1']
    #allocation4 [shape = 's32[1]{0}', space=sflag, size = 0x4, scoped, tag = 'scoped memory for tpu_custom_call.1']
    #allocation5 [shape = 'u8[8192]{0}', space=vmem, size = 0x2000, scoped, tag = 'output window, operand 0, single buffered']
    %8 = vsyncpa [#allocation3], 0
    %9 = vsyncpa [#allocation4], 0
    // Predicated region
    $region2: #{tpu_custom_call.1} parent=1 // pred_check
      _
    $region3: #{tpu_custom_call.1} parent=1 // pred_check_branch
      %11 = sbr.rel (0) target = $region5
    $region4: #{tpu_custom_call.1} parent=1 // pred_region
      _
    $region5: #{tpu_custom_call.1} parent=1 // pred_fallthru
      _
    // Predicated region
    $region6: #{tpu_custom_call.1} parent=1 // pred_check
      _
    $region7: #{tpu_custom_call.1} parent=1 // pred_check_branch
      %13 = sbr.rel (0) target = $region9
    $region8: #{tpu_custom_call.1} parent=1 // pred_region
      %s15 = ssub.s32 256, 256
      %16 = vsyncadd [#allocation3], %s15
      %s17 = sshll.u32 [#allocation2], 4
      %s18 = int_to_ptr.vmem [resolvable:$true] %s17
      %23 = dma.hbm_to_vmem [thread:$0]  %s1, 256, %s18, [#allocation3], 128, 128, 8
    $region9: #{tpu_custom_call.1} parent=1 // pred_fallthru
      _
    // Predicated region
    $region10: #{tpu_custom_call.1} parent=1 // pred_check
      _
    $region11: #{tpu_custom_call.1} parent=1 // pred_check_branch
      %25 = sbr.rel (0) target = $region13
    $region12: #{tpu_custom_call.1} parent=1 // pred_region
      _
    $region13: #{tpu_custom_call.1} parent=1 // pred_fallthru
      _
    // Predicated region
    $region14: #{tpu_custom_call.1} parent=1 // pred_check
      _
    $region15: #{tpu_custom_call.1} parent=1 // pred_check_branch
      %27 = sbr.rel (0) target = $region17
    $region16: #{tpu_custom_call.1} parent=1 // pred_region
      %28 = dma.done [#allocation3], 256
    $region17: #{tpu_custom_call.1} parent=1 // pred_fallthru
      _
    %v29 = vld [vmem:[#allocation2] sm:$0xff]
    %v30 = vld [vmem:[#allocation2 + $0x8] sm:$0x3]
    %v31 = vld [vmem:[%s0] sm:$0xff]
    %v32 = vld [vmem:[%s0 + $0x8] sm:$0x3]
    %v33 = vld [vmem:[%s2] sm:$0xff]
    %v34 = vld [vmem:[%s2 + $0x8] sm:$0x3]
    %36 = vset.pattern.permute.xlu0 0
    %37 = vperm.xlu0 %36, %v33
    %v38 = vpop.permute.xlu0 %37
    %41 = vset.pattern.permute.xlu0 0
    %42 = vperm.xlu0 %41, %v34
    %v43 = vpop.permute.xlu0 %42
    %vm45 = vcmask 80896
    %v47 = vsel %vm45, %v29, 0
    %v50 = vsel %vm45, %v30, 0
    %vm52 = vcmask 1041408
    %v54 = vsel %vm52, %v32, 0
    %56 = vmatprep.subr.mxu0 0.0
    %57 = vmatpush1.msra.mxu0 %v31
    %58 = vmatprep.subr.mxu0 0.0
    %59 = vmatpush1.msra.mxu0 %v54
    %60 = vmatprep.subr.mxu0 0.0
    %61 = vmatpush1.msra.mxu0 0.0
    %62 = vmatprep.subr.mxu0 0.0
    %63 = vmatpush1.msra.mxu0 0.0
    %64 = vmatprep.subr.mxu0 0.0
    %65 = vmatpush1.msra.mxu0 0.0
    %66 = vmatprep.subr.mxu0 0.0
    %67 = vmatpush1.msra.mxu0 0.0
    %68 = vmatprep.subr.mxu0 0.0
    %69 = vmatpush1.msra.mxu0 0.0
    %70 = vmatprep.subr.mxu0 0.0
    %71 = vmatpush1.msra.mxu0 0.0
    %72 = vmatprep.subr.mxu0 0.0
    %73 = vmatpush1.msra.mxu0 0.0
    %74 = vmatprep.subr.mxu0 0.0
    %75 = vmatpush1.msra.mxu0 0.0
    %76 = vmatprep.subr.mxu0 0.0
    %77 = vmatpush1.msra.mxu0 0.0
    %78 = vmatprep.subr.mxu0 0.0
    %79 = vmatpush1.msra.mxu0 0.0
    %80 = vmatprep.subr.mxu0 0.0
    %81 = vmatpush1.msra.mxu0 0.0
    %82 = vmatprep.subr.mxu0 0.0
    %83 = vmatpush1.msra.mxu0 0.0
    %84 = vmatprep.subr.mxu0 0.0
    %85 = vmatpush1.msra.mxu0 0.0
    %86 = vmatprep.subr.mxu0 0.0
    %87 = vmatpush1.msra.mxu0 0.0
    %88 = vmatprep.subr.mxu0 0.0
    %89 = vmatpush1.msra.mxu0 0.0
    %90 = vmatprep.subr.mxu0 0.0
    %91 = vmatpush1.msra.mxu0 0.0
    %92 = vmatprep.subr.mxu0 0.0
    %93 = vmatpush1.msra.mxu0 0.0
    %94 = vmatprep.subr.mxu0 0.0
    %95 = vmatpush1.msra.mxu0 0.0
    %96 = vmatprep.subr.mxu0 0.0
    %97 = vmatpush1.msra.mxu0 0.0
    %98 = vmatprep.subr.mxu0 0.0
    %99 = vmatpush1.msra.mxu0 0.0
    %100 = vmatprep.subr.mxu0 0.0
    %101 = vmatpush1.msra.mxu0 0.0
    %102 = vmatprep.subr.mxu0 0.0
    %103 = vmatpush1.msra.mxu0 0.0
    %104 = vmatprep.subr.mxu0 0.0
    %105 = vmatpush1.msra.mxu0 0.0
    %106 = vmatprep.subr.mxu0 0.0
    %107 = vmatpush1.msra.mxu0 0.0
    %108 = vmatprep.subr.mxu0 0.0
    %109 = vmatpush1.msra.mxu0 0.0
    %110 = vmatprep.subr.mxu0 0.0
    %111 = vmatpush1.msra.mxu0 0.0
    %112 = vmatprep.subr.mxu0 0.0
    %113 = vmatpush1.msra.mxu0 0.0
    %114 = vmatprep.subr.mxu0 0.0
    %115 = vmatpush1.msra.mxu0 0.0
    %116 = vmatprep.subr.mxu0 0.0
    %117 = vmatpush1.msra.mxu0 0.0
    %118 = vmatprep.subr.mxu0 0.0
    %119 = vmatpush1.msra.mxu0 0.0
    %120 = vmatprep.mubr.f32.mxu0 0.0
    %121 = vmatmul.mubr.f32.gmra.mrb[0].mxu0 %v47
    %v122 = vpop.f32.mrb[0].mxu0
    %v123 = vadd.f32 %v38, %v122
    %v124 = vpop.f32.mrb[0].mxu0
    %125 = vmatprep.mubr.f32.mxu0 0.0
    %126 = vmatmul.mubr.f32.gmra.mrb[0].mxu0 %v50
    %v127 = vpop.f32.mrb[0].mxu0
    %v128 = vadd.f32 %v43, %v127
    %v129 = vpop.f32.mrb[0].mxu0
    %130 = vdwg.mxu0
    %v131 = vmax.f32 %v123, 0.0
    %v132 = vmax.f32 %v128, 0.0
    %vm133 = vcmask 523264
    %134 = vst.msk [vmem:[#allocation5] sm:$0xff] %vm133, %v131
    %vm135 = vcmask 517120
    %136 = vst.msk [vmem:[#allocation5 + $0x8] sm:$0x3] %vm135, %v132
    // Predicated region
    $region18: #{tpu_custom_call.1} parent=1 // pred_check
      _
    $region19: #{tpu_custom_call.1} parent=1 // pred_check_branch
      %138 = sbr.rel (0) target = $region21
    $region20: #{tpu_custom_call.1} parent=1 // pred_region
      %s140 = ssub.s32 256, 256
      %141 = vsyncadd [#allocation4], %s140
      %s142 = sshll.u32 [#allocation5], 4
      %s143 = int_to_ptr.vmem [resolvable:$true] %s142
      %148 = dma.vmem_to_hbm [thread:$0]  %s143, 256, %s3, [#allocation4], 128, 128, 8
    $region21: #{tpu_custom_call.1} parent=1 // pred_fallthru
      _
    // Predicated region
    $region22: #{tpu_custom_call.1} parent=1 // pred_check
      _
    $region23: #{tpu_custom_call.1} parent=1 // pred_check_branch
      %150 = sbr.rel (0) target = $region25
    $region24: #{tpu_custom_call.1} parent=1 // pred_region
      %151 = dma.done [#allocation4], 256
    $region25: #{tpu_custom_call.1} parent=1 // pred_fallthru
      _
    %152 = vsyncpa [#allocation3], 1
    %153 = vsyncpa [#allocation4], 1

</llo_original>
